<compile_context>
chip_gen: v7x
topology: tpu7x:2x2x1
jax: 0.10.0
libtpu: 0.0.40
codegen_flags: <defaults>
</compile_context>

<pallas_src>
import jax
import jax.numpy as jnp
from jax.experimental import pallas as pl
from jax.experimental.pallas import tpu as pltpu

_BETA = 0.01
_EPS = 1e-8


# ---------------------------------------------------------------------------
# Fused Pallas kernel
# ---------------------------------------------------------------------------
def _make_fused_kernel(total_seg_px):
    inv_seg = 1.0 / float(total_seg_px)

    def kernel(seg_ref, seg_tgt_ref, lab_ref, lab_tgt_ref,
               bb_in_ref, bb_tgt_ref, n_ref,
               out_ref, seg_acc_ref):
        ni = pl.program_id(0)
        hi = pl.program_id(1)
        is_first = jnp.logical_and(ni == 0, hi == 0)
        is_last = jnp.logical_and(ni == pl.num_programs(0) - 1,
                                  hi == pl.num_programs(1) - 1)

        @pl.when(is_first)
        def _():
            seg_acc_ref[...] = jnp.zeros_like(seg_acc_ref)

        # --- segmentation CE: per-pixel terms of this (TN, C, T) block ------
        # bf16 logits stay bf16 in HBM; upcast happens on the VMEM tile only.
        logits = seg_ref[...].astype(jnp.float32)                  # (TN, C, T)
        tgt = seg_tgt_ref[...].astype(jnp.int32)                    # (TN, 1, T)
        m = jnp.max(logits, axis=1, keepdims=True)                  # (TN, 1, T)
        lse = m + jnp.log(jnp.sum(jnp.exp(logits - m), axis=1, keepdims=True))
        cls = jax.lax.broadcasted_iota(jnp.int32, logits.shape, 1)
        tgt_logit = jnp.sum(jnp.where(cls == tgt, logits, 0.0),
                            axis=1, keepdims=True)                  # (TN, 1, T)
        # Lane-shaped accumulator: sum over the folded-N axis is just vreg
        # adds (VPU); no per-step cross-lane reduce, no (1,1) scalar carry.
        seg_acc_ref[...] += jnp.sum(lse - tgt_logit, axis=0, keepdims=True)

        # --- last grid step: tiny losses + SoftAdapt weighting --------------
        @pl.when(is_last)
        def _():
            # labels cross-entropy (mean over rows)
            ll = lab_ref[...].astype(jnp.float32)                   # (Nl, Cl)
            lt = lab_tgt_ref[...].astype(jnp.int32)                  # (Nl, 1)
            lm = jnp.max(ll, axis=-1, keepdims=True)
            llse = lm + jnp.log(jnp.sum(jnp.exp(ll - lm), axis=-1, keepdims=True))
            lcol = jax.lax.broadcasted_iota(jnp.int32, ll.shape, 1)
            lpick = jnp.sum(jnp.where(lcol == lt, ll, 0.0),
                            axis=-1, keepdims=True)
            labels_loss = (jnp.sum(llse - lpick) / ll.shape[0]).reshape(1, 1)

            # bbox MSE (mean)
            d = (bb_in_ref[...].astype(jnp.float32)
                 - bb_tgt_ref[...].astype(jnp.float32))
            bboxes_loss = (jnp.sum(d * d) / d.size).reshape(1, 1)

            # segmentation CE: single deferred cross-lane reduce
            seg_loss = (jnp.sum(seg_acc_ref[...]) * inv_seg).reshape(1, 1)

            # SoftAdapt weighting (weights detached by construction: this is a
            # forward-only kernel, matching .data.item()).
            nvec = n_ref[...].astype(jnp.float32)                    # (1, 3)
            nmax = jnp.max(nvec, axis=-1, keepdims=True)             # (1, 1)
            w = jnp.exp(_BETA * (nvec - nmax))                       # (1, 3)
            a = labels_loss * w[:, 0:1]
            b = seg_loss * w[:, 1:2]
            c = 0.001 * bboxes_loss * w[:, 2:3]
            denom = a + b + c + _EPS
            g0 = a / denom
            g1 = b / denom
            g2 = c / denom

            # NOTE: the reference returns g2 * bboxes_loss (no 0.001) as the
            # third component while the total uses g2 * bboxes_loss * 0.001;
            # this asymmetry is preserved intentionally.
            out_ref[:, 0:1] = (g0 * labels_loss + g1 * seg_loss
                               + g2 * bboxes_loss * 0.001)
            out_ref[:, 1:2] = g0 * labels_loss
            out_ref[:, 2:3] = g1 * seg_loss
            out_ref[:, 3:4] = g2 * bboxes_loss

    return kernel


# ---------------------------------------------------------------------------
# Generation-aware VMEM budgeting + tile selection
# ---------------------------------------------------------------------------
def _tpu_vmem_tier():
    """(seg-stream VMEM budget, vmem_limit_bytes or None) per TPU generation."""
    kind = ""
    try:
        kind = jax.devices()[0].device_kind.lower()
    except Exception:
        pass
    if "v5" in kind or "v6" in kind:
        return 24 << 20, 64 << 20       # 128 MiB physical VMEM per TC
    if "v7" in kind or "7x" in kind:
        return 16 << 20, 40 << 20       # 64 MiB physical VMEM per TC
    return 8 << 20, None                 # unknown / older: stay conservative


def _choose_seg_tiles(N, C, HW, logit_isz, tgt_isz, budget_bytes):
    """VMEM-budget-driven (TILE_N, TILE_HW).

    Accounts for 2x double-buffered logits + targets and the lane-shaped f32
    accumulator (padded to 8 sublanes -> 32 B per lane column). Blocks stay
    lane-dense: TILE_HW is a multiple of 128 (or the full HW extent)."""
    per_px_stream = 2 * (C * logit_isz + tgt_isz)
    if HW % 128 != 0:
        tile_hw = HW                      # lowering requires the full extent
    else:
        max_px = max(128, budget_bytes // (per_px_stream + 32))
        tile_hw = max(128, min(HW, (max_px // 128) * 128))
        while HW % tile_hw != 0:
            tile_hw -= 128
    tile_n = 1
    if tile_hw == HW:
        # The whole pixel axis fits: fold several images per grid step so each
        # step moves a multi-MiB block instead of tens of KiB.
        per_img = HW * per_px_stream
        avail = max(per_img, budget_bytes - 32 * HW)
        tile_n = int(max(1, min(N, avail // per_img)))
        while N % tile_n != 0:
            tile_n -= 1
    return tile_n, tile_hw


# ---------------------------------------------------------------------------
# Wrapper
# ---------------------------------------------------------------------------
def soft_adapt_loss(input_labels, input_segmentations, input_bboxes,
                    target_labels, target_segmentations, target_bboxes,
                    n=None, tile_n=None, tile_hw=None):
    """Forward pass of SoftAdaptLoss (first-call semantics: counter=1, n=ones(3))."""
    N, C, H, W = input_segmentations.shape
    HW = H * W
    Nl, Cl = input_labels.shape

    # Free (contiguous) reshapes -- stay NCHW, pixel axis lane-dense.
    # Dtypes are passed through unchanged (bf16 logits / narrow int targets
    # halve or quarter the dominant HBM streams); upcast happens in-kernel.
    seg_logits = input_segmentations.reshape(N, C, HW)
    seg_tgt = target_segmentations.reshape(N, 1, HW)
    if not jnp.issubdtype(seg_tgt.dtype, jnp.integer):
        seg_tgt = seg_tgt.astype(jnp.int32)
    lab_tgt = target_labels.reshape(Nl, 1)
    if not jnp.issubdtype(lab_tgt.dtype, jnp.integer):
        lab_tgt = lab_tgt.astype(jnp.int32)
    if n is None:
        n = jnp.ones((3,), jnp.float32)
    n2d = jnp.asarray(n, jnp.float32).reshape(1, 3)

    budget, vmem_limit = _tpu_vmem_tier()
    auto_n, auto_hw = _choose_seg_tiles(
        N, C, HW,
        jnp.dtype(seg_logits.dtype).itemsize,
        jnp.dtype(seg_tgt.dtype).itemsize,
        budget)
    if tile_hw is None:
        tile_hw = auto_hw
    if tile_n is None:
        tile_n = auto_n if tile_hw == auto_hw else 1
    assert HW % tile_hw == 0
    assert tile_hw == HW or tile_hw % 128 == 0
    assert N % tile_n == 0
    num_n = N // tile_n
    num_hw = HW // tile_hw

    kernel = _make_fused_kernel(total_seg_px=N * HW)
    const = lambda i, j: (0, 0)

    # CostEstimate from actual dtypes (keeps XLA's overlap scheduling honest).
    def _nbytes(x):
        return int(x.size) * int(jnp.dtype(x.dtype).itemsize)
    flops = 8 * N * HW * C + 8 * Nl * Cl + 3 * int(input_bboxes.size) + 64
    transcendentals = N * HW * (C + 1) + Nl * (Cl + 1) + 8
    bytes_accessed = (_nbytes(seg_logits) + _nbytes(seg_tgt)
                      + _nbytes(input_labels) + _nbytes(lab_tgt)
                      + _nbytes(input_bboxes) + _nbytes(target_bboxes)
                      + _nbytes(n2d) + 16)

    cp_kwargs = dict(dimension_semantics=("arbitrary", "arbitrary"))
    if vmem_limit is not None:
        cp_kwargs["vmem_limit_bytes"] = int(vmem_limit)

    out = pl.pallas_call(
        kernel,
        out_shape=jax.ShapeDtypeStruct((1, 4), jnp.float32),
        grid_spec=pltpu.PrefetchScalarGridSpec(
            num_scalar_prefetch=0,
            grid=(num_n, num_hw),
            in_specs=[
                # gridded, lane-dense segmentation blocks (streamed)
                pl.BlockSpec((tile_n, C, tile_hw), lambda i, j: (i, 0, j)),
                pl.BlockSpec((tile_n, 1, tile_hw), lambda i, j: (i, 0, j)),
                # tiny grid-resident blocks (consumed on the last step)
                pl.BlockSpec((Nl, Cl), const),
                pl.BlockSpec((Nl, 1), const),
                pl.BlockSpec(input_bboxes.shape, const),
                pl.BlockSpec(target_bboxes.shape, const),
                pl.BlockSpec((1, 3), const),
            ],
            out_specs=pl.BlockSpec((1, 4), const),
            scratch_shapes=[pltpu.VMEM((1, 1, tile_hw), jnp.float32)],
        ),
        # Single shared accumulator + last-step finalize -> both axes arbitrary.
        compiler_params=pltpu.CompilerParams(**cp_kwargs),
        cost_estimate=pl.CostEstimate(flops=flops,
                                      transcendentals=transcendentals,
                                      bytes_accessed=bytes_accessed),
    )(seg_logits, seg_tgt, input_labels, lab_tgt,
      input_bboxes, target_bboxes, n2d)

    return out[0, 0], out[0, 1], out[0, 2], out[0, 3]


# ---------------------------------------------------------------------------
# Pure-JAX reference (for correctness check)
# ---------------------------------------------------------------------------
def _ref_softadapt(il, iseg, ibb, tl, tseg, tbb, n):
    def ce(logits, tgt):
        logits = logits.astype(jnp.float32)
        lse = jax.nn.logsumexp(logits, axis=-1)
        picked = jnp.take_along_axis(logits, tgt[:, None], axis=-1)[:, 0]
        return jnp.mean(lse - picked)

    Cc = iseg.shape[1]
    ll = ce(il, tl)
    sl = ce(jnp.transpose(iseg, (0, 2, 3, 1)).reshape(-1, Cc), tseg.reshape(-1))
    bl = jnp.mean((ibb.astype(jnp.float32) - tbb.astype(jnp.float32)) ** 2)
    beta = 0.01
    nmax = jnp.max(n)
    a = ll * jnp.exp(beta * (n[0] - nmax))
    b = sl * jnp.exp(beta * (n[1] - nmax))
    c = 0.001 * bl * jnp.exp(beta * (n[2] - nmax))
    d = a + b + c + 1e-8
    g0, g1, g2 = a / d, b / d, c / d
    return (g0 * ll + g1 * sl + g2 * bl * 0.001, g0 * ll, g1 * sl, g2 * bl)


def _check(out, ref, tol):
    for got, want in zip(out, ref):
        assert abs(float(got) - float(want)) < tol, (float(got), float(want))


# ---------------------------------------------------------------------------
if __name__ == "__main__":
    key = jax.random.PRNGKey(0)
    k1, k2, k3, k4, k5, k6 = jax.random.split(key, 6)

    # labels head: batch=8, 16 classes
    N_lab, C_lab = 8, 16
    input_labels = jax.random.normal(k1, (N_lab, C_lab), jnp.float32)
    target_labels = jax.random.randint(k2, (N_lab,), 0, C_lab, jnp.int32)

    # segmentation head: NCHW = (2, 4, 32, 32), target (2, 32, 32)
    N_seg, C_seg, H, W = 2, 4, 32, 32
    input_seg = jax.random.normal(k3, (N_seg, C_seg, H, W), jnp.float32)
    target_seg = jax.random.randint(k4, (N_seg, H, W), 0, C_seg, jnp.int32)

    # bbox head: (8, 4)
    input_bb = jax.random.normal(k5, (N_lab, 4), jnp.float32)
    target_bb = jax.random.normal(k6, (N_lab, 4), jnp.float32)

    n_ones = jnp.ones((3,), jnp.float32)
    ref = _ref_softadapt(input_labels, input_seg, input_bb,
                         target_labels, target_seg, target_bb, n_ones)

    # 1) Default VMEM-budget-driven tiling (folds N, single big block here).
    out = soft_adapt_loss(input_labels, input_seg, input_bb,
                          target_labels, target_seg, target_bb)
    out = jax.block_until_ready(out)
    _check(out, ref, 1e-4)

    # 2) Forced small tiles: grid (2, 4) exercises gridded accumulation.
    out = soft_adapt_loss(input_labels, input_seg, input_bb,
                          target_labels, target_seg, target_bb,
                          tile_n=1, tile_hw=256)
    out = jax.block_until_ready(out)
    _check(out, ref, 1e-4)

    # 3) Folded-N tiles: grid (1, 2) exercises TILE_N > 1 accumulation.
    out = soft_adapt_loss(input_labels, input_seg, input_bb,
                          target_labels, target_seg, target_bb,
                          tile_n=2, tile_hw=512)
    out = jax.block_until_ready(out)
    _check(out, ref, 1e-4)

    # 4) bf16 segmentation logits stay bf16 in HBM (half the dominant stream).
    input_seg_bf16 = input_seg.astype(jnp.bfloat16)
    ref_bf16 = _ref_softadapt(input_labels,
                              input_seg_bf16.astype(jnp.float32), input_bb,
                              target_labels, target_seg, target_bb, n_ones)
    out = soft_adapt_loss(input_labels, input_seg_bf16, input_bb,
                          target_labels, target_seg, target_bb,
                          tile_n=1, tile_hw=256)
    out = jax.block_until_ready(out)
    _check(out, ref_bf16, 1e-3)

    print("KERNEL_OK")
</pallas_src>

<mosaic_0001>
module attributes {stable_mosaic.version = 11 : i64} {
  func.func @kernel(%arg0: i32, %arg1: i32, %arg2: memref<2x4x1024xf32, #tpu.memory_space<vmem>>, %arg3: memref<2x1x1024xi32, #tpu.memory_space<vmem>>, %arg4: memref<8x16xf32, #tpu.memory_space<vmem>>, %arg5: memref<8x1xi32, #tpu.memory_space<vmem>>, %arg6: memref<8x4xf32, #tpu.memory_space<vmem>>, %arg7: memref<8x4xf32, #tpu.memory_space<vmem>>, %arg8: memref<1x3xf32, #tpu.memory_space<vmem>>, %arg9: memref<1x4xf32, #tpu.memory_space<vmem>>, %arg10: memref<1x1x1024xf32, #tpu.memory_space<vmem>>) attributes {dimension_semantics = [#tpu.dimension_semantics<arbitrary>, #tpu.dimension_semantics<arbitrary>], iteration_bounds = array<i64: 1, 1>, scalar_prefetch = 0 : i64, scratch_operands = 1 : i64, tpu.core_type = #tpu.core_type<tc>, window_params = [{transform_indices = @transform_0, window_bounds = array<i64: 2, 4, 1024>}, {transform_indices = @transform_1, window_bounds = array<i64: 2, 1, 1024>}, {pipeline_mode = #tpu.pipeline_mode<synchronous>, transform_indices = @transform_2, window_bounds = array<i64: 8, 16>}, {pipeline_mode = #tpu.pipeline_mode<synchronous>, transform_indices = @transform_3, window_bounds = array<i64: 8, 1>}, {pipeline_mode = #tpu.pipeline_mode<synchronous>, transform_indices = @transform_4, window_bounds = array<i64: 8, 4>}, {pipeline_mode = #tpu.pipeline_mode<synchronous>, transform_indices = @transform_5, window_bounds = array<i64: 8, 4>}, {pipeline_mode = #tpu.pipeline_mode<synchronous>, transform_indices = @transform_6, window_bounds = array<i64: 1, 3>}, {pipeline_mode = #tpu.pipeline_mode<synchronous>, transform_indices = @transform_7, window_bounds = array<i64: 1, 4>}]} {
    %c0_i32 = arith.constant 0 : i32
    %0 = arith.cmpi eq, %arg0, %c0_i32 : i32
    %c0_i32_0 = arith.constant 0 : i32
    %1 = arith.cmpi eq, %arg1, %c0_i32_0 : i32
    %2 = arith.andi %0, %1 : i1
    %c0_i32_1 = arith.constant 0 : i32
    %3 = arith.cmpi eq, %arg0, %c0_i32_1 : i32
    %c0_i32_2 = arith.constant 0 : i32
    %4 = arith.cmpi eq, %arg1, %c0_i32_2 : i32
    %5 = arith.andi %3, %4 : i1
    %6 = arith.extui %2 : i1 to i32
    %c0_i32_3 = arith.constant 0 : i32
    %7 = arith.cmpi ne, %6, %c0_i32_3 : i32
    scf.if %7 {
      %cst_20 = arith.constant 0.000000e+00 : f32
      %34 = vector.broadcast %cst_20 : f32 to vector<1x1x1024xf32>
      %c0_21 = arith.constant 0 : index
      %c0_22 = arith.constant 0 : index
      %c0_23 = arith.constant 0 : index
      %35 = vector.load %arg10[%c0_21, %c0_22, %c0_23] : memref<1x1x1024xf32, #tpu.memory_space<vmem>>, vector<1x1x1024xf32>
      tpu.vector_store %arg10[%c0_21, %c0_22, %c0_23], %34 {strides = array<i32>} : memref<1x1x1024xf32, #tpu.memory_space<vmem>>, vector<1x1x1024xf32>,
    } else {
    }
    %c0 = arith.constant 0 : index
    %c0_4 = arith.constant 0 : index
    %c0_5 = arith.constant 0 : index
    %8 = vector.load %arg2[%c0, %c0_4, %c0_5] : memref<2x4x1024xf32, #tpu.memory_space<vmem>>, vector<2x4x1024xf32>
    %c0_6 = arith.constant 0 : index
    %c0_7 = arith.constant 0 : index
    %c0_8 = arith.constant 0 : index
    %9 = vector.load %arg3[%c0_6, %c0_7, %c0_8] : memref<2x1x1024xi32, #tpu.memory_space<vmem>>, vector<2x1x1024xi32>
    %cst = arith.constant dense<0xFF800000> : vector<2x1024xf32>
    %10 = vector.multi_reduction <maximumf>, %8, %cst [1] : vector<2x4x1024xf32> to vector<2x1024xf32>
    %11 = vector.shape_cast %10 : vector<2x1024xf32> to vector<2x1x1024xf32>
    %12 = vector.broadcast %11 : vector<2x1x1024xf32> to vector<2x4x1024xf32>
    %13 = arith.subf %8, %12 : vector<2x4x1024xf32>
    %14 = math.exp %13 : vector<2x4x1024xf32>
    %cst_9 = arith.constant dense<0.000000e+00> : vector<2x1024xf32>
    %15 = vector.multi_reduction <add>, %14, %cst_9 [1] : vector<2x4x1024xf32> to vector<2x1024xf32>
    %16 = vector.shape_cast %15 : vector<2x1024xf32> to vector<2x1x1024xf32>
    %17 = math.log %16 : vector<2x1x1024xf32>
    %18 = arith.addf %11, %17 : vector<2x1x1024xf32>
    %19 = tpu.iota {dimensions = array<i32: 1>} : vector<2x4x1024xi32>
    %20 = vector.broadcast %9 : vector<2x1x1024xi32> to vector<2x4x1024xi32>
    %21 = arith.cmpi eq, %19, %20 : vector<2x4x1024xi32>
    %cst_10 = arith.constant 0.000000e+00 : f32
    %22 = vector.broadcast %cst_10 : f32 to vector<2x4x1024xf32>
    %23 = arith.select %21, %8, %22 : vector<2x4x1024xi1>, vector<2x4x1024xf32>
    %cst_11 = arith.constant dense<0.000000e+00> : vector<2x1024xf32>
    %24 = vector.multi_reduction <add>, %23, %cst_11 [1] : vector<2x4x1024xf32> to vector<2x1024xf32>
    %25 = vector.shape_cast %24 : vector<2x1024xf32> to vector<2x1x1024xf32>
    %c0_12 = arith.constant 0 : index
    %c0_13 = arith.constant 0 : index
    %c0_14 = arith.constant 0 : index
    %26 = vector.load %arg10[%c0_12, %c0_13, %c0_14] : memref<1x1x1024xf32, #tpu.memory_space<vmem>>, vector<1x1x1024xf32>
    %27 = arith.subf %18, %25 : vector<2x1x1024xf32>
    %cst_15 = arith.constant dense<0.000000e+00> : vector<1x1024xf32>
    %28 = vector.multi_reduction <add>, %27, %cst_15 [0] : vector<2x1x1024xf32> to vector<1x1024xf32>
    %29 = vector.shape_cast %28 : vector<1x1024xf32> to vector<1x1x1024xf32>
    %30 = arith.addf %26, %29 : vector<1x1x1024xf32>
    %c0_16 = arith.constant 0 : index
    %c0_17 = arith.constant 0 : index
    %c0_18 = arith.constant 0 : index
    %31 = vector.load %arg10[%c0_16, %c0_17, %c0_18] : memref<1x1x1024xf32, #tpu.memory_space<vmem>>, vector<1x1x1024xf32>
    tpu.vector_store %arg10[%c0_16, %c0_17, %c0_18], %30 {strides = array<i32>} : memref<1x1x1024xf32, #tpu.memory_space<vmem>>, vector<1x1x1024xf32>,
    %32 = arith.extui %5 : i1 to i32
    %c0_i32_19 = arith.constant 0 : i32
    %33 = arith.cmpi ne, %32, %c0_i32_19 : i32
    scf.if %33 {
      %c0_20 = arith.constant 0 : index
      %c0_21 = arith.constant 0 : index
      %34 = vector.load %arg4[%c0_20, %c0_21] : memref<8x16xf32, #tpu.memory_space<vmem>>, vector<8x16xf32>
      %c0_22 = arith.constant 0 : index
      %c0_23 = arith.constant 0 : index
      %35 = vector.load %arg5[%c0_22, %c0_23] : memref<8x1xi32, #tpu.memory_space<vmem>>, vector<8x1xi32>
      %cst_24 = arith.constant dense<0xFF800000> : vector<8xf32>
      %36 = vector.multi_reduction <maximumf>, %34, %cst_24 [1] : vector<8x16xf32> to vector<8xf32>
      %37 = vector.shape_cast %36 : vector<8xf32> to vector<8x1xf32>
      %38 = vector.broadcast %37 : vector<8x1xf32> to vector<8x16xf32>
      %39 = arith.subf %34, %38 : vector<8x16xf32>
      %40 = math.exp %39 : vector<8x16xf32>
      %cst_25 = arith.constant dense<0.000000e+00> : vector<8xf32>
      %41 = vector.multi_reduction <add>, %40, %cst_25 [1] : vector<8x16xf32> to vector<8xf32>
      %42 = vector.shape_cast %41 : vector<8xf32> to vector<8x1xf32>
      %43 = math.log %42 : vector<8x1xf32>
      %44 = arith.addf %37, %43 : vector<8x1xf32>
      %45 = tpu.iota {dimensions = array<i32: 1>} : vector<8x16xi32>
      %46 = vector.broadcast %35 : vector<8x1xi32> to vector<8x16xi32>
      %47 = arith.cmpi eq, %45, %46 : vector<8x16xi32>
      %cst_26 = arith.constant 0.000000e+00 : f32
      %48 = vector.broadcast %cst_26 : f32 to vector<8x16xf32>
      %49 = arith.select %47, %34, %48 : vector<8x16xi1>, vector<8x16xf32>
      %cst_27 = arith.constant dense<0.000000e+00> : vector<8xf32>
      %50 = vector.multi_reduction <add>, %49, %cst_27 [1] : vector<8x16xf32> to vector<8xf32>
      %51 = vector.shape_cast %50 : vector<8xf32> to vector<8x1xf32>
      %52 = arith.subf %44, %51 : vector<8x1xf32>
      %53 = vector.shape_cast %52 : vector<8x1xf32> to vector<1x8x1xf32>
      %cst_28 = arith.constant dense<0.000000e+00> : vector<1xf32>
      %54 = vector.multi_reduction <add>, %53, %cst_28 [1, 2] : vector<1x8x1xf32> to vector<1xf32>
      %55 = vector.shape_cast %54 : vector<1xf32> to vector<1x1x1xf32>
      %56 = vector.extract %55[0, 0, 0] : f32 from vector<1x1x1xf32>
      %cst_29 = arith.constant 8.000000e+00 : f32
      %57 = arith.divf %56, %cst_29 : f32
      %58 = vector.broadcast %57 : f32 to vector<1x1xf32>
      %c0_30 = arith.constant 0 : index
      %c0_31 = arith.constant 0 : index
      %59 = vector.load %arg6[%c0_30, %c0_31] : memref<8x4xf32, #tpu.memory_space<vmem>>, vector<8x4xf32>
      %c0_32 = arith.constant 0 : index
      %c0_33 = arith.constant 0 : index
      %60 = vector.load %arg7[%c0_32, %c0_33] : memref<8x4xf32, #tpu.memory_space<vmem>>, vector<8x4xf32>
      %61 = arith.subf %59, %60 : vector<8x4xf32>
      %62 = arith.mulf %61, %61 : vector<8x4xf32>
      %63 = vector.shape_cast %62 : vector<8x4xf32> to vector<1x8x4xf32>
      %cst_34 = arith.constant dense<0.000000e+00> : vector<1xf32>
      %64 = vector.multi_reduction <add>, %63, %cst_34 [1, 2] : vector<1x8x4xf32> to vector<1xf32>
      %65 = vector.shape_cast %64 : vector<1xf32> to vector<1x1x1xf32>
      %66 = vector.extract %65[0, 0, 0] : f32 from vector<1x1x1xf32>
      %cst_35 = arith.constant 3.200000e+01 : f32
      %67 = arith.divf %66, %cst_35 : f32
      %68 = vector.broadcast %67 : f32 to vector<1x1xf32>
      %c0_36 = arith.constant 0 : index
      %c0_37 = arith.constant 0 : index
      %c0_38 = arith.constant 0 : index
      %69 = vector.load %arg10[%c0_36, %c0_37, %c0_38] : memref<1x1x1024xf32, #tpu.memory_space<vmem>>, vector<1x1x1024xf32>
      %70 = vector.shape_cast %69 : vector<1x1x1024xf32> to vector<1x1x1x1024xf32>
      %cst_39 = arith.constant dense<0.000000e+00> : vector<1xf32>
      %71 = vector.multi_reduction <add>, %70, %cst_39 [1, 2, 3] : vector<1x1x1x1024xf32> to vector<1xf32>
      %72 = vector.shape_cast %71 : vector<1xf32> to vector<1x1x1x1xf32>
      %73 = vector.extract %72[0, 0, 0, 0] : f32 from vector<1x1x1x1xf32>
      %cst_40 = arith.constant 4.8828125E-4 : f32
      %74 = arith.mulf %73, %cst_40 : f32
      %75 = vector.broadcast %74 : f32 to vector<1x1xf32>
      %c0_41 = arith.constant 0 : index
      %c0_42 = arith.constant 0 : index
      %76 = vector.load %arg8[%c0_41, %c0_42] : memref<1x3xf32, #tpu.memory_space<vmem>>, vector<1x3xf32>
      %cst_43 = arith.constant dense<0xFF800000> : vector<1xf32>
      %77 = vector.multi_reduction <maximumf>, %76, %cst_43 [1] : vector<1x3xf32> to vector<1xf32>
      %78 = vector.shape_cast %77 : vector<1xf32> to vector<1x1xf32>
      %79 = vector.broadcast %78 : vector<1x1xf32> to vector<1x3xf32>
      %80 = arith.subf %76, %79 : vector<1x3xf32>
      %cst_44 = arith.constant 0.00999999977 : f32
      %81 = vector.broadcast %cst_44 : f32 to vector<1x3xf32>
      %82 = arith.mulf %81, %80 : vector<1x3xf32>
      %83 = math.exp %82 : vector<1x3xf32>
      %84 = vector.extract_strided_slice %83 {offsets = [0, 0], sizes = [1, 1], strides = [1, 1]} : vector<1x3xf32> to vector<1x1xf32>
      %85 = arith.mulf %58, %84 : vector<1x1xf32>
      %86 = vector.extract_strided_slice %83 {offsets = [0, 1], sizes = [1, 1], strides = [1, 1]} : vector<1x3xf32> to vector<1x1xf32>
      %87 = arith.mulf %75, %86 : vector<1x1xf32>
      %cst_45 = arith.constant 1.000000e-03 : f32
      %88 = vector.broadcast %cst_45 : f32 to vector<1x1xf32>
      %89 = arith.mulf %88, %68 : vector<1x1xf32>
      %90 = vector.extract_strided_slice %83 {offsets = [0, 2], sizes = [1, 1], strides = [1, 1]} : vector<1x3xf32> to vector<1x1xf32>
      %91 = arith.mulf %89, %90 : vector<1x1xf32>
      %92 = arith.addf %85, %87 : vector<1x1xf32>
      %93 = arith.addf %92, %91 : vector<1x1xf32>
      %cst_46 = arith.constant 9.99999993E-9 : f32
      %94 = vector.broadcast %cst_46 : f32 to vector<1x1xf32>
      %95 = arith.addf %93, %94 : vector<1x1xf32>
      %96 = arith.divf %85, %95 : vector<1x1xf32>
      %97 = arith.divf %87, %95 : vector<1x1xf32>
      %98 = arith.divf %91, %95 : vector<1x1xf32>
      %99 = arith.mulf %96, %58 : vector<1x1xf32>
      %100 = arith.mulf %97, %75 : vector<1x1xf32>
      %101 = arith.addf %99, %100 : vector<1x1xf32>
      %102 = arith.mulf %98, %68 : vector<1x1xf32>
      %cst_47 = arith.constant 1.000000e-03 : f32
      %103 = vector.broadcast %cst_47 : f32 to vector<1x1xf32>
      %104 = arith.mulf %102, %103 : vector<1x1xf32>
      %105 = arith.addf %101, %104 : vector<1x1xf32>
      %c0_48 = arith.constant 0 : index
      %c0_49 = arith.constant 0 : index
      %106 = vector.load %arg9[%c0_48, %c0_49] : memref<1x4xf32, #tpu.memory_space<vmem>>, vector<1x1xf32>
      tpu.vector_store %arg9[%c0_48, %c0_49], %105 {strides = array<i32>} : memref<1x4xf32, #tpu.memory_space<vmem>>, vector<1x1xf32>,
      %107 = arith.mulf %96, %58 : vector<1x1xf32>
      %c0_50 = arith.constant 0 : index
      %c1 = arith.constant 1 : index
      %108 = vector.load %arg9[%c0_50, %c1] : memref<1x4xf32, #tpu.memory_space<vmem>>, vector<1x1xf32>
      tpu.vector_store %arg9[%c0_50, %c1], %107 {strides = array<i32>} : memref<1x4xf32, #tpu.memory_space<vmem>>, vector<1x1xf32>,
      %109 = arith.mulf %97, %75 : vector<1x1xf32>
      %c0_51 = arith.constant 0 : index
      %c2 = arith.constant 2 : index
      %110 = vector.load %arg9[%c0_51, %c2] : memref<1x4xf32, #tpu.memory_space<vmem>>, vector<1x1xf32>
      tpu.vector_store %arg9[%c0_51, %c2], %109 {strides = array<i32>} : memref<1x4xf32, #tpu.memory_space<vmem>>, vector<1x1xf32>,
      %111 = arith.mulf %98, %68 : vector<1x1xf32>
      %c0_52 = arith.constant 0 : index
      %c3 = arith.constant 3 : index
      %112 = vector.load %arg9[%c0_52, %c3] : memref<1x4xf32, #tpu.memory_space<vmem>>, vector<1x1xf32>
      tpu.vector_store %arg9[%c0_52, %c3], %111 {strides = array<i32>} : memref<1x4xf32, #tpu.memory_space<vmem>>, vector<1x1xf32>,
    } else {
    }
    return
  }
  func.func @transform_0(%arg0: i32, %arg1: i32) -> (i32, i32, i32) {
    %c0_i32 = arith.constant 0 : i32
    %c0_i32_0 = arith.constant 0 : i32
    return %arg0, %c0_i32, %arg1 : i32, i32, i32
  }
  func.func @transform_1(%arg0: i32, %arg1: i32) -> (i32, i32, i32) {
    %c0_i32 = arith.constant 0 : i32
    %c0_i32_0 = arith.constant 0 : i32
    return %arg0, %c0_i32, %arg1 : i32, i32, i32
  }
  func.func @transform_2(%arg0: i32, %arg1: i32) -> (i32, i32) {
    %c0_i32 = arith.constant 0 : i32
    %c0_i32_0 = arith.constant 0 : i32
    %c0_i32_1 = arith.constant 0 : i32
    return %c0_i32, %c0_i32_0 : i32, i32
  }
  func.func @transform_3(%arg0: i32, %arg1: i32) -> (i32, i32) {
    %c0_i32 = arith.constant 0 : i32
    %c0_i32_0 = arith.constant 0 : i32
    %c0_i32_1 = arith.constant 0 : i32
    return %c0_i32, %c0_i32_0 : i32, i32
  }
  func.func @transform_4(%arg0: i32, %arg1: i32) -> (i32, i32) {
    %c0_i32 = arith.constant 0 : i32
    %c0_i32_0 = arith.constant 0 : i32
    %c0_i32_1 = arith.constant 0 : i32
    return %c0_i32, %c0_i32_0 : i32, i32
  }
  func.func @transform_5(%arg0: i32, %arg1: i32) -> (i32, i32) {
    %c0_i32 = arith.constant 0 : i32
    %c0_i32_0 = arith.constant 0 : i32
    %c0_i32_1 = arith.constant 0 : i32
    return %c0_i32, %c0_i32_0 : i32, i32
  }
  func.func @transform_6(%arg0: i32, %arg1: i32) -> (i32, i32) {
    %c0_i32 = arith.constant 0 : i32
    %c0_i32_0 = arith.constant 0 : i32
    %c0_i32_1 = arith.constant 0 : i32
    return %c0_i32, %c0_i32_0 : i32, i32
  }
  func.func @transform_7(%arg0: i32, %arg1: i32) -> (i32, i32) {
    %c0_i32 = arith.constant 0 : i32
    %c0_i32_0 = arith.constant 0 : i32
    %c0_i32_1 = arith.constant 0 : i32
    return %c0_i32, %c0_i32_0 : i32, i32
  }
}

</mosaic_0001>

<llo_original>
// kernel: tpu_custom_call.1
$region0: #{tpu_custom_call.1}
  #allocation0 [shape = 'u32[]', space=smem, size = 0x4, offset = 0x4, fixed_abs, tag = 'smem constant byte address 0x4 - core index']
  #allocation1 [shape = 'u32[144,128]{1,0:T(1,128)}', space=vmem, size = 0x12000, scoped, tag = 'internal scratch']
  #allocation2 [shape = 'f32[1,1,1024]{2,1,0:T(1,128)}', space=vmem, size = 0x1000, scoped, tag = 'scratch operand']
  %s0 = inlined_call_operand.hbm [shape: f32[2,4,1024], index: 0, kind: input, shape index: {}]
  %s1 = inlined_call_operand.vmem [shape: s32[2,1,1024], index: 1, kind: input, shape index: {}]
  %s2 = inlined_call_operand.vmem [shape: f32[8,16], index: 2, kind: input, shape index: {}]
  %s3 = inlined_call_operand.vmem [shape: s32[8,1], index: 3, kind: input, shape index: {}]
  %s4 = inlined_call_operand.vmem [shape: f32[8,4], index: 4, kind: input, shape index: {}]
  %s5 = inlined_call_operand.vmem [shape: f32[8,4], index: 5, kind: input, shape index: {}]
  %s6 = inlined_call_operand.vmem [shape: f32[1,3], index: 6, kind: input, shape index: {}]
  %s7 = inlined_call_operand.hbm [shape: f32[1,4], index: 7, kind: output, shape index: {}]
  %s8 = sld [smem:[#allocation0]]
  $region50: #{tpu_custom_call.1} parent=0
    _
  %s10 = ssub.s32 1, %s8
  %s11 = scalar_select 0, %s10, %s8
  $region1: #{tpu_custom_call.1} parent=0
    #allocation3 [shape = 'u8[32768]{0}', space=vmem, size = 0x8000, scoped, tag = 'input window, operand 0, single buffered']
    #allocation4 [shape = 's32[1]{0}', space=sflag, size = 0x4, scoped, tag = 'scoped memory for tpu_custom_call.1']
    #allocation5 [shape = 's32[1]{0}', space=sflag, size = 0x4, scoped, tag = 'scoped memory for tpu_custom_call.1']
    #allocation6 [shape = 'u8[512]{0}', space=vmem, size = 0x400, scoped, tag = 'output window, operand 0, single buffered']
    %12 = vsyncpa [#allocation4], 0
    %13 = vsyncpa [#allocation5], 0
    // Predicated region
    $region2: #{tpu_custom_call.1} parent=1 // pred_check
      _
    $region3: #{tpu_custom_call.1} parent=1 // pred_check_branch
      %15 = sbr.rel (0) target = $region5
    $region4: #{tpu_custom_call.1} parent=1 // pred_region
      %s17 = ssub.s32 1024, 1024
      %18 = vsyncadd [#allocation4], %s17
      %s19 = sshll.u32 [#allocation3], 4
      %s20 = int_to_ptr.vmem [resolvable:$true] %s19
      %25 = dma.hbm_to_vmem [thread:$0]  %s0, 1024, %s20, [#allocation4], 512, 512, 32
    $region5: #{tpu_custom_call.1} parent=1 // pred_fallthru
      _
    // Predicated region
    $region6: #{tpu_custom_call.1} parent=1 // pred_check
      _
    $region7: #{tpu_custom_call.1} parent=1 // pred_check_branch
      %27 = sbr.rel (0) target = $region9
    $region8: #{tpu_custom_call.1} parent=1 // pred_region
      _
    $region9: #{tpu_custom_call.1} parent=1 // pred_fallthru
      _
    // Predicated region
    $region10: #{tpu_custom_call.1} parent=1 // pred_check
      _
    $region11: #{tpu_custom_call.1} parent=1 // pred_check_branch
      %29 = sbr.rel (0) target = $region13
    $region12: #{tpu_custom_call.1} parent=1 // pred_region
      _
    $region13: #{tpu_custom_call.1} parent=1 // pred_fallthru
      _
    // Predicated region
    $region14: #{tpu_custom_call.1} parent=1 // pred_check
      _
    $region15: #{tpu_custom_call.1} parent=1 // pred_check_branch
      %31 = sbr.rel (0) target = $region17
    $region16: #{tpu_custom_call.1} parent=1 // pred_region
      _
    $region17: #{tpu_custom_call.1} parent=1 // pred_fallthru
      _
    // Predicated region
    $region18: #{tpu_custom_call.1} parent=1 // pred_check
      _
    $region19: #{tpu_custom_call.1} parent=1 // pred_check_branch
      %33 = sbr.rel (0) target = $region21
    $region20: #{tpu_custom_call.1} parent=1 // pred_region
      _
    $region21: #{tpu_custom_call.1} parent=1 // pred_fallthru
      _
    // Predicated region
    $region22: #{tpu_custom_call.1} parent=1 // pred_check
      _
    $region23: #{tpu_custom_call.1} parent=1 // pred_check_branch
      %35 = sbr.rel (0) target = $region25
    $region24: #{tpu_custom_call.1} parent=1 // pred_region
      _
    $region25: #{tpu_custom_call.1} parent=1 // pred_fallthru
      _
    // Predicated region
    $region26: #{tpu_custom_call.1} parent=1 // pred_check
      _
    $region27: #{tpu_custom_call.1} parent=1 // pred_check_branch
      %37 = sbr.rel (0) target = $region29
    $region28: #{tpu_custom_call.1} parent=1 // pred_region
      _
    $region29: #{tpu_custom_call.1} parent=1 // pred_fallthru
      _
    // Predicated region
    $region30: #{tpu_custom_call.1} parent=1 // pred_check
      _
    $region31: #{tpu_custom_call.1} parent=1 // pred_check_branch
      %39 = sbr.rel (0) target = $region33
    $region32: #{tpu_custom_call.1} parent=1 // pred_region
      %40 = dma.done [#allocation4], 1024
    $region33: #{tpu_custom_call.1} parent=1 // pred_fallthru
      _
    %p41 = scmp.eq.s32.totalorder 0, 0
    %p42 = scmp.eq.s32.totalorder 0, 0
    %p43 = pnand %p41, %p42
    %p44 = pneg %p43
    // Predicated region
    $region34: #{tpu_custom_call.1} parent=1 // pred_check
      _
    $region35: #{tpu_custom_call.1} parent=1 // pred_check_branch
      %46 = sbr.rel (%p43) target = $region37
    $region36: #{tpu_custom_call.1} parent=1 // pred_region
      %47 = vst [vmem:[#allocation2] sm:$0xff] 0.0
    $region37: #{tpu_custom_call.1} parent=1 // pred_fallthru
      _
    %v48 = vld [vmem:[#allocation3] sm:$0xff]
    %v49 = vld [vmem:[#allocation3 + $0x8] sm:$0xff]
    %v50 = vld [vmem:[#allocation3 + $0x10] sm:$0xff]
    %v51 = vld [vmem:[#allocation3 + $0x18] sm:$0xff]
    %v52 = vld [vmem:[#allocation3 + $0x20] sm:$0xff]
    %v53 = vld [vmem:[#allocation3 + $0x28] sm:$0xff]
    %v54 = vld [vmem:[#allocation3 + $0x30] sm:$0xff]
    %v55 = vld [vmem:[#allocation3 + $0x38] sm:$0xff]
    %v56 = vld [vmem:[%s1] sm:$0xff]
    %v57 = vld [vmem:[%s1 + $0x8] sm:$0xff]
    %v66 = vcombine.high %v48, %v48
    %v67 = vcombine.high %v49, %v49
    %v68 = vcombine.high %v50, %v50
    %v69 = vcombine.high %v51, %v51
    %v70 = vcombine.high %v52, %v52
    %v71 = vcombine.high %v53, %v53
    %v72 = vcombine.high %v54, %v54
    %v73 = vcombine.high %v55, %v55
    %vm82 = vcmask 1043456
    %v83 = vsel %vm82, %v48, -inf
    %v84 = vrot.slane %v83, 4
    %v85 = vmax.f32 %v83, %v84
    %v86 = vrot.slane %v85, 2
    %v87 = vmax.f32 %v85, %v86
    %v88 = vrot.slane %v87, 1
    %v89 = vmax.f32 %v87, %v88
    %v90 = vsel %vm82, %v66, -inf
    %v91 = vrot.slane %v90, 4
    %v92 = vmax.f32 %v90, %v91
    %v93 = vrot.slane %v92, 2
    %v94 = vmax.f32 %v92, %v93
    %v95 = vrot.slane %v94, 1
    %v96 = vmax.f32 %v94, %v95
    %v97 = vsel %vm82, %v49, -inf
    %v98 = vrot.slane %v97, 4
    %v99 = vmax.f32 %v97, %v98
    %v100 = vrot.slane %v99, 2
    %v101 = vmax.f32 %v99, %v100
    %v102 = vrot.slane %v101, 1
    %v103 = vmax.f32 %v101, %v102
    %v104 = vsel %vm82, %v67, -inf
    %v105 = vrot.slane %v104, 4
    %v106 = vmax.f32 %v104, %v105
    %v107 = vrot.slane %v106, 2
    %v108 = vmax.f32 %v106, %v107
    %v109 = vrot.slane %v108, 1
    %v110 = vmax.f32 %v108, %v109
    %v111 = vsel %vm82, %v50, -inf
    %v112 = vrot.slane %v111, 4
    %v113 = vmax.f32 %v111, %v112
    %v114 = vrot.slane %v113, 2
    %v115 = vmax.f32 %v113, %v114
    %v116 = vrot.slane %v115, 1
    %v117 = vmax.f32 %v115, %v116
    %v118 = vsel %vm82, %v68, -inf
    %v119 = vrot.slane %v118, 4
    %v120 = vmax.f32 %v118, %v119
    %v121 = vrot.slane %v120, 2
    %v122 = vmax.f32 %v120, %v121
    %v123 = vrot.slane %v122, 1
    %v124 = vmax.f32 %v122, %v123
    %v125 = vsel %vm82, %v51, -inf
    %v126 = vrot.slane %v125, 4
    %v127 = vmax.f32 %v125, %v126
    %v128 = vrot.slane %v127, 2
    %v129 = vmax.f32 %v127, %v128
    %v130 = vrot.slane %v129, 1
    %v131 = vmax.f32 %v129, %v130
    %v132 = vsel %vm82, %v69, -inf
    %v133 = vrot.slane %v132, 4
    %v134 = vmax.f32 %v132, %v133
    %v135 = vrot.slane %v134, 2
    %v136 = vmax.f32 %v134, %v135
    %v137 = vrot.slane %v136, 1
    %v138 = vmax.f32 %v136, %v137
    %v139 = vsel %vm82, %v52, -inf
    %v140 = vrot.slane %v139, 4
    %v141 = vmax.f32 %v139, %v140
    %v142 = vrot.slane %v141, 2
    %v143 = vmax.f32 %v141, %v142
    %v144 = vrot.slane %v143, 1
    %v145 = vmax.f32 %v143, %v144
    %v146 = vsel %vm82, %v70, -inf
    %v147 = vrot.slane %v146, 4
    %v148 = vmax.f32 %v146, %v147
    %v149 = vrot.slane %v148, 2
    %v150 = vmax.f32 %v148, %v149
    %v151 = vrot.slane %v150, 1
    %v152 = vmax.f32 %v150, %v151
    %v153 = vsel %vm82, %v53, -inf
    %v154 = vrot.slane %v153, 4
    %v155 = vmax.f32 %v153, %v154
    %v156 = vrot.slane %v155, 2
    %v157 = vmax.f32 %v155, %v156
    %v158 = vrot.slane %v157, 1
    %v159 = vmax.f32 %v157, %v158
    %v160 = vsel %vm82, %v71, -inf
    %v161 = vrot.slane %v160, 4
    %v162 = vmax.f32 %v160, %v161
    %v163 = vrot.slane %v162, 2
    %v164 = vmax.f32 %v162, %v163
    %v165 = vrot.slane %v164, 1
    %v166 = vmax.f32 %v164, %v165
    %v167 = vsel %vm82, %v54, -inf
    %v168 = vrot.slane %v167, 4
    %v169 = vmax.f32 %v167, %v168
    %v170 = vrot.slane %v169, 2
    %v171 = vmax.f32 %v169, %v170
    %v172 = vrot.slane %v171, 1
    %v173 = vmax.f32 %v171, %v172
    %v174 = vsel %vm82, %v72, -inf
    %v175 = vrot.slane %v174, 4
    %v176 = vmax.f32 %v174, %v175
    %v177 = vrot.slane %v176, 2
    %v178 = vmax.f32 %v176, %v177
    %v179 = vrot.slane %v178, 1
    %v180 = vmax.f32 %v178, %v179
    %v181 = vsel %vm82, %v55, -inf
    %v182 = vrot.slane %v181, 4
    %v183 = vmax.f32 %v181, %v182
    %v184 = vrot.slane %v183, 2
    %v185 = vmax.f32 %v183, %v184
    %v186 = vrot.slane %v185, 1
    %v187 = vmax.f32 %v185, %v186
    %v188 = vsel %vm82, %v73, -inf
    %v189 = vrot.slane %v188, 4
    %v190 = vmax.f32 %v188, %v189
    %v191 = vrot.slane %v190, 2
    %v192 = vmax.f32 %v190, %v191
    %v193 = vrot.slane %v192, 1
    %v194 = vmax.f32 %v192, %v193
    %v211 = vcombine.low %v89, %v96
    %v212 = vcombine.low %v103, %v110
    %v213 = vcombine.low %v117, %v124
    %v214 = vcombine.low %v131, %v138
    %v215 = vcombine.low %v145, %v152
    %v216 = vcombine.low %v159, %v166
    %v217 = vcombine.low %v173, %v180
    %v218 = vcombine.low %v187, %v194
    %v227 = vsub.f32 %v48, %v211
    %v228 = vsub.f32 %v49, %v212
    %v229 = vsub.f32 %v50, %v213
    %v230 = vsub.f32 %v51, %v214
    %v231 = vsub.f32 %v52, %v215
    %v232 = vsub.f32 %v53, %v216
    %v233 = vsub.f32 %v54, %v217
    %v234 = vsub.f32 %v55, %v218
    %v235 = vmul.f32 %v227, 1.442695
    %v236 = vpow.pop %v235
    %v237 = vmul.f32 %v228, 1.442695
    %v238 = vpow.pop %v237
    %v239 = vmul.f32 %v229, 1.442695
    %v240 = vpow.pop %v239
    %v241 = vmul.f32 %v230, 1.442695
    %v242 = vpow.pop %v241
    %v243 = vmul.f32 %v231, 1.442695
    %v244 = vpow.pop %v243
    %v245 = vmul.f32 %v232, 1.442695
    %v246 = vpow.pop %v245
    %v247 = vmul.f32 %v233, 1.442695
    %v248 = vpow.pop %v247
    %v249 = vmul.f32 %v234, 1.442695
    %v250 = vpow.pop %v249
    %v259 = vcombine.high %v236, %v236
    %v260 = vcombine.high %v238, %v238
    %v261 = vcombine.high %v240, %v240
    %v262 = vcombine.high %v242, %v242
    %v263 = vcombine.high %v244, %v244
    %v264 = vcombine.high %v246, %v246
    %v265 = vcombine.high %v248, %v248
    %v266 = vcombine.high %v250, %v250
    %v275 = vsel %vm82, %v236, 0.0
    %v276 = vrot.slane %v275, 4
    %v277 = vadd.f32 %v275, %v276
    %v278 = vrot.slane %v277, 2
    %v279 = vadd.f32 %v277, %v278
    %v280 = vrot.slane %v279, 1
    %v281 = vadd.f32 %v279, %v280
    %v282 = vsel %vm82, %v259, 0.0
    %v283 = vrot.slane %v282, 4
    %v284 = vadd.f32 %v282, %v283
    %v285 = vrot.slane %v284, 2
    %v286 = vadd.f32 %v284, %v285
    %v287 = vrot.slane %v286, 1
    %v288 = vadd.f32 %v286, %v287
    %v289 = vsel %vm82, %v238, 0.0
    %v290 = vrot.slane %v289, 4
    %v291 = vadd.f32 %v289, %v290
    %v292 = vrot.slane %v291, 2
    %v293 = vadd.f32 %v291, %v292
    %v294 = vrot.slane %v293, 1
    %v295 = vadd.f32 %v293, %v294
    %v296 = vsel %vm82, %v260, 0.0
    %v297 = vrot.slane %v296, 4
    %v298 = vadd.f32 %v296, %v297
    %v299 = vrot.slane %v298, 2
    %v300 = vadd.f32 %v298, %v299
    %v301 = vrot.slane %v300, 1
    %v302 = vadd.f32 %v300, %v301
    %v303 = vsel %vm82, %v240, 0.0
    %v304 = vrot.slane %v303, 4
    %v305 = vadd.f32 %v303, %v304
    %v306 = vrot.slane %v305, 2
    %v307 = vadd.f32 %v305, %v306
    %v308 = vrot.slane %v307, 1
    %v309 = vadd.f32 %v307, %v308
    %v310 = vsel %vm82, %v261, 0.0
    %v311 = vrot.slane %v310, 4
    %v312 = vadd.f32 %v310, %v311
    %v313 = vrot.slane %v312, 2
    %v314 = vadd.f32 %v312, %v313
    %v315 = vrot.slane %v314, 1
    %v316 = vadd.f32 %v314, %v315
    %v317 = vsel %vm82, %v242, 0.0
    %v318 = vrot.slane %v317, 4
    %v319 = vadd.f32 %v317, %v318
    %v320 = vrot.slane %v319, 2
    %v321 = vadd.f32 %v319, %v320
    %v322 = vrot.slane %v321, 1
    %v323 = vadd.f32 %v321, %v322
    %v324 = vsel %vm82, %v262, 0.0
    %v325 = vrot.slane %v324, 4
    %v326 = vadd.f32 %v324, %v325
    %v327 = vrot.slane %v326, 2
    %v328 = vadd.f32 %v326, %v327
    %v329 = vrot.slane %v328, 1
    %v330 = vadd.f32 %v328, %v329
    %v331 = vsel %vm82, %v244, 0.0
    %v332 = vrot.slane %v331, 4
    %v333 = vadd.f32 %v331, %v332
    %v334 = vrot.slane %v333, 2
    %v335 = vadd.f32 %v333, %v334
    %v336 = vrot.slane %v335, 1
    %v337 = vadd.f32 %v335, %v336
    %v338 = vsel %vm82, %v263, 0.0
    %v339 = vrot.slane %v338, 4
    %v340 = vadd.f32 %v338, %v339
    %v341 = vrot.slane %v340, 2
    %v342 = vadd.f32 %v340, %v341
    %v343 = vrot.slane %v342, 1
    %v344 = vadd.f32 %v342, %v343
    %v345 = vsel %vm82, %v246, 0.0
    %v346 = vrot.slane %v345, 4
    %v347 = vadd.f32 %v345, %v346
    %v348 = vrot.slane %v347, 2
    %v349 = vadd.f32 %v347, %v348
    %v350 = vrot.slane %v349, 1
    %v351 = vadd.f32 %v349, %v350
    %v352 = vsel %vm82, %v264, 0.0
    %v353 = vrot.slane %v352, 4
    %v354 = vadd.f32 %v352, %v353
    %v355 = vrot.slane %v354, 2
    %v356 = vadd.f32 %v354, %v355
    %v357 = vrot.slane %v356, 1
    %v358 = vadd.f32 %v356, %v357
    %v359 = vsel %vm82, %v248, 0.0
    %v360 = vrot.slane %v359, 4
    %v361 = vadd.f32 %v359, %v360
    %v362 = vrot.slane %v361, 2
    %v363 = vadd.f32 %v361, %v362
    %v364 = vrot.slane %v363, 1
    %v365 = vadd.f32 %v363, %v364
    %v366 = vsel %vm82, %v265, 0.0
    %v367 = vrot.slane %v366, 4
    %v368 = vadd.f32 %v366, %v367
    %v369 = vrot.slane %v368, 2
    %v370 = vadd.f32 %v368, %v369
    %v371 = vrot.slane %v370, 1
    %v372 = vadd.f32 %v370, %v371
    %v373 = vsel %vm82, %v250, 0.0
    %v374 = vrot.slane %v373, 4
    %v375 = vadd.f32 %v373, %v374
    %v376 = vrot.slane %v375, 2
    %v377 = vadd.f32 %v375, %v376
    %v378 = vrot.slane %v377, 1
    %v379 = vadd.f32 %v377, %v378
    %v380 = vsel %vm82, %v266, 0.0
    %v381 = vrot.slane %v380, 4
    %v382 = vadd.f32 %v380, %v381
    %v383 = vrot.slane %v382, 2
    %v384 = vadd.f32 %v382, %v383
    %v385 = vrot.slane %v384, 1
    %v386 = vadd.f32 %v384, %v385
    %v387 = vlog2.pop %v281
    %v388 = vmul.f32 %v387, 0.6931472
    %v389 = vlog2.pop %v288
    %v390 = vmul.f32 %v389, 0.6931472
    %v391 = vlog2.pop %v295
    %v392 = vmul.f32 %v391, 0.6931472
    %v393 = vlog2.pop %v302
    %v394 = vmul.f32 %v393, 0.6931472
    %v395 = vlog2.pop %v309
    %v396 = vmul.f32 %v395, 0.6931472
    %v397 = vlog2.pop %v316
    %v398 = vmul.f32 %v397, 0.6931472
    %v399 = vlog2.pop %v323
    %v400 = vmul.f32 %v399, 0.6931472
    %v401 = vlog2.pop %v330
    %v402 = vmul.f32 %v401, 0.6931472
    %v403 = vlog2.pop %v337
    %v404 = vmul.f32 %v403, 0.6931472
    %v405 = vlog2.pop %v344
    %v406 = vmul.f32 %v405, 0.6931472
    %v407 = vlog2.pop %v351
    %v408 = vmul.f32 %v407, 0.6931472
    %v409 = vlog2.pop %v358
    %v410 = vmul.f32 %v409, 0.6931472
    %v411 = vlog2.pop %v365
    %v412 = vmul.f32 %v411, 0.6931472
    %v413 = vlog2.pop %v372
    %v414 = vmul.f32 %v413, 0.6931472
    %v415 = vlog2.pop %v379
    %v416 = vmul.f32 %v415, 0.6931472
    %v417 = vlog2.pop %v386
    %v418 = vmul.f32 %v417, 0.6931472
    %v419 = vadd.f32 %v89, %v388
    %v420 = vadd.f32 %v96, %v390
    %v421 = vadd.f32 %v103, %v392
    %v422 = vadd.f32 %v110, %v394
    %v423 = vadd.f32 %v117, %v396
    %v424 = vadd.f32 %v124, %v398
    %v425 = vadd.f32 %v131, %v400
    %v426 = vadd.f32 %v138, %v402
    %v427 = vadd.f32 %v145, %v404
    %v428 = vadd.f32 %v152, %v406
    %v429 = vadd.f32 %v159, %v408
    %v430 = vadd.f32 %v166, %v410
    %v431 = vadd.f32 %v173, %v412
    %v432 = vadd.f32 %v180, %v414
    %v433 = vadd.f32 %v187, %v416
    %v434 = vadd.f32 %v194, %v418
    %v435 = vlaneseq
    %v436 = vshrl.u32 %v435, 7
    %v437 = vlaneseq
    %v438 = vshrl.u32 %v437, 7
    %v439 = vsub.s32 0, %v438
    %v440 = vrot.slane %v56, %v439
    %v441 = vlaneseq
    %v442 = vshrl.u32 %v441, 7
    %v443 = vsub.s32 1, %v442
    %v444 = vrot.slane %v56, %v443
    %v445 = vlaneseq
    %v446 = vshrl.u32 %v445, 7
    %v447 = vsub.s32 2, %v446
    %v448 = vrot.slane %v56, %v447
    %v449 = vlaneseq
    %v450 = vshrl.u32 %v449, 7
    %v451 = vsub.s32 3, %v450
    %v452 = vrot.slane %v56, %v451
    %v453 = vlaneseq
    %v454 = vshrl.u32 %v453, 7
    %v455 = vsub.s32 4, %v454
    %v456 = vrot.slane %v56, %v455
    %v457 = vlaneseq
    %v458 = vshrl.u32 %v457, 7
    %v459 = vsub.s32 5, %v458
    %v460 = vrot.slane %v56, %v459
    %v461 = vlaneseq
    %v462 = vshrl.u32 %v461, 7
    %v463 = vsub.s32 6, %v462
    %v464 = vrot.slane %v56, %v463
    %v465 = vlaneseq
    %v466 = vshrl.u32 %v465, 7
    %v467 = vsub.s32 7, %v466
    %v468 = vrot.slane %v56, %v467
    %v469 = vlaneseq
    %v470 = vshrl.u32 %v469, 7
    %v471 = vsub.s32 0, %v470
    %v472 = vrot.slane %v57, %v471
    %v473 = vlaneseq
    %v474 = vshrl.u32 %v473, 7
    %v475 = vsub.s32 1, %v474
    %v476 = vrot.slane %v57, %v475
    %v477 = vlaneseq
    %v478 = vshrl.u32 %v477, 7
    %v479 = vsub.s32 2, %v478
    %v480 = vrot.slane %v57, %v479
    %v481 = vlaneseq
    %v482 = vshrl.u32 %v481, 7
    %v483 = vsub.s32 3, %v482
    %v484 = vrot.slane %v57, %v483
    %v485 = vlaneseq
    %v486 = vshrl.u32 %v485, 7
    %v487 = vsub.s32 4, %v486
    %v488 = vrot.slane %v57, %v487
    %v489 = vlaneseq
    %v490 = vshrl.u32 %v489, 7
    %v491 = vsub.s32 5, %v490
    %v492 = vrot.slane %v57, %v491
    %v493 = vlaneseq
    %v494 = vshrl.u32 %v493, 7
    %v495 = vsub.s32 6, %v494
    %v496 = vrot.slane %v57, %v495
    %v497 = vlaneseq
    %v498 = vshrl.u32 %v497, 7
    %v499 = vsub.s32 7, %v498
    %v500 = vrot.slane %v57, %v499
    %vm501 = vcmp.eq.s32.totalorder %v436, %v440
    %vm502 = vcmp.eq.s32.totalorder %v436, %v444
    %vm503 = vcmp.eq.s32.totalorder %v436, %v448
    %vm504 = vcmp.eq.s32.totalorder %v436, %v452
    %vm505 = vcmp.eq.s32.totalorder %v436, %v456
    %vm506 = vcmp.eq.s32.totalorder %v436, %v460
    %vm507 = vcmp.eq.s32.totalorder %v436, %v464
    %vm508 = vcmp.eq.s32.totalorder %v436, %v468
    %vm509 = vcmp.eq.s32.totalorder %v436, %v472
    %vm510 = vcmp.eq.s32.totalorder %v436, %v476
    %vm511 = vcmp.eq.s32.totalorder %v436, %v480
    %vm512 = vcmp.eq.s32.totalorder %v436, %v484
    %vm513 = vcmp.eq.s32.totalorder %v436, %v488
    %vm514 = vcmp.eq.s32.totalorder %v436, %v492
    %vm515 = vcmp.eq.s32.totalorder %v436, %v496
    %vm516 = vcmp.eq.s32.totalorder %v436, %v500
    %v517 = vsel %vm501, %v48, 0.0
    %v518 = vsel %vm502, %v66, 0.0
    %v519 = vsel %vm503, %v49, 0.0
    %v520 = vsel %vm504, %v67, 0.0
    %v521 = vsel %vm505, %v50, 0.0
    %v522 = vsel %vm506, %v68, 0.0
    %v523 = vsel %vm507, %v51, 0.0
    %v524 = vsel %vm508, %v69, 0.0
    %v525 = vsel %vm509, %v52, 0.0
    %v526 = vsel %vm510, %v70, 0.0
    %v527 = vsel %vm511, %v53, 0.0
    %v528 = vsel %vm512, %v71, 0.0
    %v529 = vsel %vm513, %v54, 0.0
    %v530 = vsel %vm514, %v72, 0.0
    %v531 = vsel %vm515, %v55, 0.0
    %v532 = vsel %vm516, %v73, 0.0
    %v533 = vsel %vm82, %v517, 0.0
    %v534 = vrot.slane %v533, 4
    %v535 = vadd.f32 %v533, %v534
    %v536 = vrot.slane %v535, 2
    %v537 = vadd.f32 %v535, %v536
    %v538 = vrot.slane %v537, 1
    %v539 = vadd.f32 %v537, %v538
    %v540 = vsel %vm82, %v518, 0.0
    %v541 = vrot.slane %v540, 4
    %v542 = vadd.f32 %v540, %v541
    %v543 = vrot.slane %v542, 2
    %v544 = vadd.f32 %v542, %v543
    %v545 = vrot.slane %v544, 1
    %v546 = vadd.f32 %v544, %v545
    %v547 = vsel %vm82, %v519, 0.0
    %v548 = vrot.slane %v547, 4
    %v549 = vadd.f32 %v547, %v548
    %v550 = vrot.slane %v549, 2
    %v551 = vadd.f32 %v549, %v550
    %v552 = vrot.slane %v551, 1
    %v553 = vadd.f32 %v551, %v552
    %v554 = vsel %vm82, %v520, 0.0
    %v555 = vrot.slane %v554, 4
    %v556 = vadd.f32 %v554, %v555
    %v557 = vrot.slane %v556, 2
    %v558 = vadd.f32 %v556, %v557
    %v559 = vrot.slane %v558, 1
    %v560 = vadd.f32 %v558, %v559
    %v561 = vsel %vm82, %v521, 0.0
    %v562 = vrot.slane %v561, 4
    %v563 = vadd.f32 %v561, %v562
    %v564 = vrot.slane %v563, 2
    %v565 = vadd.f32 %v563, %v564
    %v566 = vrot.slane %v565, 1
    %v567 = vadd.f32 %v565, %v566
    %v568 = vsel %vm82, %v522, 0.0
    %v569 = vrot.slane %v568, 4
    %v570 = vadd.f32 %v568, %v569
    %v571 = vrot.slane %v570, 2
    %v572 = vadd.f32 %v570, %v571
    %v573 = vrot.slane %v572, 1
    %v574 = vadd.f32 %v572, %v573
    %v575 = vsel %vm82, %v523, 0.0
    %v576 = vrot.slane %v575, 4
    %v577 = vadd.f32 %v575, %v576
    %v578 = vrot.slane %v577, 2
    %v579 = vadd.f32 %v577, %v578
    %v580 = vrot.slane %v579, 1
    %v581 = vadd.f32 %v579, %v580
    %v582 = vsel %vm82, %v524, 0.0
    %v583 = vrot.slane %v582, 4
    %v584 = vadd.f32 %v582, %v583
    %v585 = vrot.slane %v584, 2
    %v586 = vadd.f32 %v584, %v585
    %v587 = vrot.slane %v586, 1
    %v588 = vadd.f32 %v586, %v587
    %v589 = vsel %vm82, %v525, 0.0
    %v590 = vrot.slane %v589, 4
    %v591 = vadd.f32 %v589, %v590
    %v592 = vrot.slane %v591, 2
    %v593 = vadd.f32 %v591, %v592
    %v594 = vrot.slane %v593, 1
    %v595 = vadd.f32 %v593, %v594
    %v596 = vsel %vm82, %v526, 0.0
    %v597 = vrot.slane %v596, 4
    %v598 = vadd.f32 %v596, %v597
    %v599 = vrot.slane %v598, 2
    %v600 = vadd.f32 %v598, %v599
    %v601 = vrot.slane %v600, 1
    %v602 = vadd.f32 %v600, %v601
    %v603 = vsel %vm82, %v527, 0.0
    %v604 = vrot.slane %v603, 4
    %v605 = vadd.f32 %v603, %v604
    %v606 = vrot.slane %v605, 2
    %v607 = vadd.f32 %v605, %v606
    %v608 = vrot.slane %v607, 1
    %v609 = vadd.f32 %v607, %v608
    %v610 = vsel %vm82, %v528, 0.0
    %v611 = vrot.slane %v610, 4
    %v612 = vadd.f32 %v610, %v611
    %v613 = vrot.slane %v612, 2
    %v614 = vadd.f32 %v612, %v613
    %v615 = vrot.slane %v614, 1
    %v616 = vadd.f32 %v614, %v615
    %v617 = vsel %vm82, %v529, 0.0
    %v618 = vrot.slane %v617, 4
    %v619 = vadd.f32 %v617, %v618
    %v620 = vrot.slane %v619, 2
    %v621 = vadd.f32 %v619, %v620
    %v622 = vrot.slane %v621, 1
    %v623 = vadd.f32 %v621, %v622
    %v624 = vsel %vm82, %v530, 0.0
    %v625 = vrot.slane %v624, 4
    %v626 = vadd.f32 %v624, %v625
    %v627 = vrot.slane %v626, 2
    %v628 = vadd.f32 %v626, %v627
    %v629 = vrot.slane %v628, 1
    %v630 = vadd.f32 %v628, %v629
    %v631 = vsel %vm82, %v531, 0.0
    %v632 = vrot.slane %v631, 4
    %v633 = vadd.f32 %v631, %v632
    %v634 = vrot.slane %v633, 2
    %v635 = vadd.f32 %v633, %v634
    %v636 = vrot.slane %v635, 1
    %v637 = vadd.f32 %v635, %v636
    %v638 = vsel %vm82, %v532, 0.0
    %v639 = vrot.slane %v638, 4
    %v640 = vadd.f32 %v638, %v639
    %v641 = vrot.slane %v640, 2
    %v642 = vadd.f32 %v640, %v641
    %v643 = vrot.slane %v642, 1
    %v644 = vadd.f32 %v642, %v643
    %v645 = vld [vmem:[#allocation2] sm:$0xff]
    %v646 = vsub.f32 %v419, %v539
    %v647 = vsub.f32 %v420, %v546
    %v648 = vsub.f32 %v421, %v553
    %v649 = vsub.f32 %v422, %v560
    %v650 = vsub.f32 %v423, %v567
    %v651 = vsub.f32 %v424, %v574
    %v652 = vsub.f32 %v425, %v581
    %v653 = vsub.f32 %v426, %v588
    %v654 = vsub.f32 %v427, %v595
    %v655 = vsub.f32 %v428, %v602
    %v656 = vsub.f32 %v429, %v609
    %v657 = vsub.f32 %v430, %v616
    %v658 = vsub.f32 %v431, %v623
    %v659 = vsub.f32 %v432, %v630
    %v660 = vsub.f32 %v433, %v637
    %v661 = vsub.f32 %v434, %v644
    %v662 = vadd.f32 %v646, %v654
    %v663 = vadd.f32 %v647, %v655
    %v664 = vadd.f32 %v648, %v656
    %v665 = vadd.f32 %v649, %v657
    %v666 = vadd.f32 %v650, %v658
    %v667 = vadd.f32 %v651, %v659
    %v668 = vadd.f32 %v652, %v660
    %v669 = vadd.f32 %v653, %v661
    %v678 = vcombine.low %v662, %v663
    %v679 = vcombine.low %v664, %v665
    %v680 = vcombine.low %v666, %v667
    %v681 = vcombine.low %v668, %v669
    %v683 = vunpack.c.l.s4 1966171168
    %v684 = vunpack.c.0.s8 %v683
    %v685 = vlaneseq
    %v686 = vshrl.u32 %v685, 7
    %v687 = vsub.s32 %v684, %v686
    %v688 = vrot.slane %v678, %v687
    %v690 = vunpack.c.l.s4 1966171168
    %v691 = vunpack.c.0.s8 %v690
    %v692 = vlaneseq
    %v693 = vshrl.u32 %v692, 7
    %v694 = vsub.s32 %v691, %v693
    %v695 = vrot.slane %v679, %v694
    %v697 = vunpack.c.l.s4 1966171168
    %v698 = vunpack.c.0.s8 %v697
    %v699 = vlaneseq
    %v700 = vshrl.u32 %v699, 7
    %v701 = vsub.s32 %v698, %v700
    %v702 = vrot.slane %v680, %v701
    %v704 = vunpack.c.l.s4 1966171168
    %v705 = vunpack.c.0.s8 %v704
    %v706 = vlaneseq
    %v707 = vshrl.u32 %v706, 7
    %v708 = vsub.s32 %v705, %v707
    %v709 = vrot.slane %v681, %v708
    %v710 = vcombine.low %v688, %v695
    %v711 = vcombine.low %v702, %v709
    %v713 = vunpack.c.l.s4 1966171168
    %v714 = vunpack.c.0.s8 %v713
    %v715 = vlaneseq
    %v716 = vshrl.u32 %v715, 7
    %v717 = vsub.s32 %v714, %v716
    %v718 = vrot.slane %v710, %v717
    %v720 = vunpack.c.l.s4 1966171168
    %v721 = vunpack.c.0.s8 %v720
    %v722 = vlaneseq
    %v723 = vshrl.u32 %v722, 7
    %v724 = vsub.s32 %v721, %v723
    %v725 = vrot.slane %v711, %v724
    %v726 = vcombine.low %v718, %v725
    %v728 = vadd.f32 %v645, %v726
    %729 = vst [vmem:[#allocation2] sm:$0xff] %v728
    // Predicated region
    $region38: #{tpu_custom_call.1} parent=1 // pred_check
      _
    $region39: #{tpu_custom_call.1} parent=1 // pred_check_branch
      %731 = sbr.rel (%p43) target = $region41
    $region40: #{tpu_custom_call.1} parent=1 // pred_region
      %v732 = vld [vmem:[%s2] sm:$0xff]
      %v733 = vld [vmem:[%s3] sm:$0xff]
      %vm734 = vcmask 130048
      %v735 = vsel %vm734, %v732, -inf
      %736 = vmax.xlane.f32.xlu0 %v735
      %v737 = vpop.xlane.xlu0 %736
      %v738 = vsub.f32 %v732, %v737
      %v739 = vmul.f32 %v738, 1.442695
      %v740 = vpow.pop %v739
      %v741 = vsel %vm734, %v740, 0.0
      %742 = vadd.xlane.f32.xlu0 %v741
      %v743 = vpop.xlane.xlu0 %742
      %v744 = vlog2.pop %v743
      %v745 = vmul.f32 %v744, 0.6931472
      %v746 = vadd.f32 %v737, %v745
      %v747 = vlaneseq
      %v748 = vand.u32 %v747, 127
      %749 = vset.pattern.permute.xlu0 0
      %750 = vperm.xlu0 %749, %v733
      %v751 = vpop.permute.xlu0 %750
      %vm752 = vcmp.eq.s32.totalorder %v748, %v751
      %v753 = vsel %vm752, %v732, 0.0
      %v754 = vsel %vm734, %v753, 0.0
      %755 = vadd.xlane.f32.xlu0 %v754
      %v756 = vpop.xlane.xlu0 %755
      %v757 = vsub.f32 %v746, %v756
      %vm758 = vcmask 7168
      %v759 = vsel %vm758, %v757, 0.0
      %760 = vadd.xlane.f32.xlu0 %v759
      %v761 = vpop.xlane.xlu0 %760
      %v762 = vrot.slane %v761, 4
      %v763 = vadd.f32 %v761, %v762
      %v764 = vrot.slane %v763, 2
      %v765 = vadd.f32 %v763, %v764
      %v766 = vrot.slane %v765, 1
      %v767 = vadd.f32 %v765, %v766
      %s768 = vtos %v767
      %v769 = vrcp.pop 8.0
      %s770 = vtos %v769
      %s771 = smul.f32 %s768, %s770
      %v772 = vstv %s771
      %v773 = vld [vmem:[%s4] sm:$0xff]
      %v774 = vld [vmem:[%s5] sm:$0xff]
      %v775 = vsub.f32 %v773, %v774
      %v776 = vmul.f32 %v775, %v775
      %vm777 = vcmask 31744
      %v778 = vsel %vm777, %v776, 0.0
      %779 = vadd.xlane.f32.xlu0 %v778
      %v780 = vpop.xlane.xlu0 %779
      %v781 = vrot.slane %v780, 4
      %v782 = vadd.f32 %v780, %v781
      %v783 = vrot.slane %v782, 2
      %v784 = vadd.f32 %v782, %v783
      %v785 = vrot.slane %v784, 1
      %v786 = vadd.f32 %v784, %v785
      %s787 = vtos %v786
      %v788 = vrcp.pop 32.0
      %s789 = vtos %v788
      %s790 = smul.f32 %s787, %s789
      %v791 = vstv %s790
      %v792 = vld [vmem:[#allocation2] sm:$0xff]
      %v794 = vlaneseq
      %v795 = vshrl.u32 %v794, 7
      %v796 = vsub.s32 0, %v795
      %v797 = vrot.slane %v792, %v796
      %v798 = vlaneseq
      %v799 = vshrl.u32 %v798, 7
      %v800 = vsub.s32 1, %v799
      %v801 = vrot.slane %v792, %v800
      %v802 = vlaneseq
      %v803 = vshrl.u32 %v802, 7
      %v804 = vsub.s32 2, %v803
      %v805 = vrot.slane %v792, %v804
      %v806 = vlaneseq
      %v807 = vshrl.u32 %v806, 7
      %v808 = vsub.s32 3, %v807
      %v809 = vrot.slane %v792, %v808
      %v810 = vlaneseq
      %v811 = vshrl.u32 %v810, 7
      %v812 = vsub.s32 4, %v811
      %v813 = vrot.slane %v792, %v812
      %v814 = vlaneseq
      %v815 = vshrl.u32 %v814, 7
      %v816 = vsub.s32 5, %v815
      %v817 = vrot.slane %v792, %v816
      %v818 = vlaneseq
      %v819 = vshrl.u32 %v818, 7
      %v820 = vsub.s32 6, %v819
      %v821 = vrot.slane %v792, %v820
      %v822 = vlaneseq
      %v823 = vshrl.u32 %v822, 7
      %v824 = vsub.s32 7, %v823
      %v825 = vrot.slane %v792, %v824
      %vm834 = vcmask 1040384
      %v835 = vsel %vm834, %v797, 0.0
      %v836 = vsel %vm834, %v801, 0.0
      %v837 = vadd.f32 %v835, %v836
      %v838 = vsel %vm834, %v805, 0.0
      %v839 = vadd.f32 %v837, %v838
      %v840 = vsel %vm834, %v809, 0.0
      %v841 = vadd.f32 %v839, %v840
      %v842 = vsel %vm834, %v813, 0.0
      %v843 = vadd.f32 %v841, %v842
      %v844 = vsel %vm834, %v817, 0.0
      %v845 = vadd.f32 %v843, %v844
      %v846 = vsel %vm834, %v821, 0.0
      %v847 = vadd.f32 %v845, %v846
      %v848 = vsel %vm834, %v825, 0.0
      %v849 = vadd.f32 %v847, %v848
      %850 = vadd.xlane.f32.xlu0 %v849
      %v851 = vpop.xlane.xlu0 %850
      %v852 = vrot.slane %v851, 4
      %v853 = vadd.f32 %v851, %v852
      %v854 = vrot.slane %v853, 2
      %v855 = vadd.f32 %v853, %v854
      %v856 = vrot.slane %v855, 1
      %v857 = vadd.f32 %v855, %v856
      %s858 = vtos %v857
      %s859 = smul.f32 %s858, 0.00048828125
      %v860 = vstv %s859
      %v861 = vld [vmem:[%s6] sm:$0x1]
      %vm862 = vcmask 16384
      %v863 = vsel %vm862, %v861, -inf
      %864 = vmax.xlane.f32.xlu0 %v863
      %v865 = vpop.xlane.xlu0 %864
      %v866 = vsub.f32 %v861, %v865
      %v867 = vmul.f32 %v866, 0.01
      %v868 = vmul.f32 %v867, 1.442695
      %v869 = vpow.pop %v868
      %v870 = vmul.f32 %v772, %v869
      %v871 = vmul.f32 %v860, %v869
      %v872 = vmul.f32 %v791, 0.001
      %v873 = vmul.f32 %v872, %v869
      %875 = vrot.lane.b32.xlu0 %v871, 127
      %v876 = vpop.permute.xlu0 %875
      %v878 = vadd.f32 %v870, %v876
      %880 = vrot.lane.b32.xlu0 %v873, 126
      %v881 = vpop.permute.xlu0 %880
      %v883 = vadd.f32 %v878, %v881
      %v884 = vadd.f32 %v883, 1e-08
      %v885 = vrcp.pop %v884
      %v886 = vmul.f32 %v870, %v885
      %888 = vrot.lane.b32.xlu0 %v884, 1
      %v889 = vpop.permute.xlu0 %888
      %v891 = vrcp.pop %v889
      %v892 = vmul.f32 %v871, %v891
      %893 = vrot.lane.b32.xlu0 %v884, 2
      %v894 = vpop.permute.xlu0 %893
      %v896 = vrcp.pop %v894
      %v897 = vmul.f32 %v873, %v896
      %v898 = vmul.f32 %v886, %v772
      %v899 = vmul.f32 %v892, %v860
      %901 = vrot.lane.b32.xlu0 %v899, 127
      %v902 = vpop.permute.xlu0 %901
      %v904 = vadd.f32 %v898, %v902
      %v905 = vmul.f32 %v897, %v791
      %v906 = vmul.f32 %v905, 0.001
      %908 = vrot.lane.b32.xlu0 %v906, 126
      %v909 = vpop.permute.xlu0 %908
      %v911 = vadd.f32 %v904, %v909
      %vm912 = vcmask 0
      %913 = vst.msk [vmem:[#allocation6] sm:$0x1] %vm912, %v911
      %v915 = vlaneseq
      %v916 = vshrl.u32 %v915, 7
      %v917 = vsub.s32 0, %v916
      %v918 = vrot.slane %v898, %v917
      %919 = vrot.lane.b32.xlu0 %v918, 1
      %v920 = vpop.permute.xlu0 %919
      %vm922 = vcmask 8200
      %923 = vst.msk [vmem:[#allocation6] sm:$0x1] %vm922, %v920
      %v924 = vlaneseq
      %v925 = vshrl.u32 %v924, 7
      %v926 = vsub.s32 0, %v925
      %v927 = vrot.slane %v899, %v926
      %928 = vrot.lane.b32.xlu0 %v927, 1
      %v929 = vpop.permute.xlu0 %928
      %vm931 = vcmask 16400
      %932 = vst.msk [vmem:[#allocation6] sm:$0x1] %vm931, %v929
      %v934 = vlaneseq
      %v935 = vshrl.u32 %v934, 7
      %v936 = vsub.s32 0, %v935
      %v937 = vrot.slane %v905, %v936
      %938 = vrot.lane.b32.xlu0 %v937, 1
      %v939 = vpop.permute.xlu0 %938
      %vm941 = vcmask 24600
      %942 = vst.msk [vmem:[#allocation6] sm:$0x1] %vm941, %v939
    $region41: #{tpu_custom_call.1} parent=1 // pred_fallthru
      _
    // Predicated region
    $region42: #{tpu_custom_call.1} parent=1 // pred_check
      _
    $region43: #{tpu_custom_call.1} parent=1 // pred_check_branch
      %944 = sbr.rel (0) target = $region45
    $region44: #{tpu_custom_call.1} parent=1 // pred_region
      %s946 = ssub.s32 16, 16
      %947 = vsyncadd [#allocation5], %s946
      %s949 = sshll.u32 [#allocation6], 4
      %s950 = int_to_ptr.vmem [resolvable:$true] %s949
      %952 = dma.vmem_to_hbm [thread:$0]  %s950, 16, %s7, [#allocation5]
    $region45: #{tpu_custom_call.1} parent=1 // pred_fallthru
      _
    // Predicated region
    $region46: #{tpu_custom_call.1} parent=1 // pred_check
      _
    $region47: #{tpu_custom_call.1} parent=1 // pred_check_branch
      %954 = sbr.rel (0) target = $region49
    $region48: #{tpu_custom_call.1} parent=1 // pred_region
      %955 = dma.done [#allocation5], 16
    $region49: #{tpu_custom_call.1} parent=1 // pred_fallthru
      _
    %956 = vsyncpa [#allocation4], 1
    %957 = vsyncpa [#allocation5], 1

</llo_original>
